<compile_context>
chip_gen: v5e
topology: v5e:2x2
jax: 0.10.0
libtpu: 0.0.40
codegen_flags: <defaults>
</compile_context>

<pallas_src>
import jax
import jax.numpy as jnp
from jax.experimental import pallas as pl
from jax.experimental.pallas import tpu as pltpu


def _linear_kernel(x_ref, w_ref, b_ref, o_ref):
    # x_ref: (TB, D_in), w_ref: (D_in, D_out), b_ref: (1, D_out), o_ref: (TB, D_out)
    acc = jnp.dot(x_ref[...], w_ref[...], preferred_element_type=jnp.float32)
    o_ref[...] = (acc + b_ref[...].astype(jnp.float32)).astype(o_ref.dtype)


def logistic_regression_s(x, w_t, b, *, block_b=1024):
    """Forward pass of LogisticRegression_S.

    x:   (B, input_dim)            f32 (or bf16 for large-batch HBM savings)
    w_t: (input_dim, output_dim)   same dtype family as x (transpose of torch weight)
    b:   (output_dim,)             f32
    returns: (B, output_dim)       f32
    """
    B, d_in = x.shape
    d_out = w_t.shape[1]
    b2 = b.reshape(1, d_out).astype(jnp.float32)

    # Batch tile: use the full batch when it is small (full-array block sidesteps
    # the (8,128) rule), otherwise a fixed multiple-of-8 tile so w_t/b stay
    # resident while x/out stream through a double-buffered pipeline.
    tb = B if B <= block_b else block_b
    grid = (pl.cdiv(B, tb),)

    out = pl.pallas_call(
        _linear_kernel,
        out_shape=jax.ShapeDtypeStruct((B, d_out), jnp.float32),
        grid=grid,
        in_specs=[
            pl.BlockSpec((tb, d_in), lambda i: (i, 0),
                         memory_space=pltpu.MemorySpace.VMEM),
            pl.BlockSpec((d_in, d_out), lambda i: (0, 0),
                         memory_space=pltpu.MemorySpace.VMEM),
            pl.BlockSpec((1, d_out), lambda i: (0, 0),
                         memory_space=pltpu.MemorySpace.VMEM),
        ],
        out_specs=pl.BlockSpec((tb, d_out), lambda i: (i, 0),
                               memory_space=pltpu.MemorySpace.VMEM),
        compiler_params=pltpu.CompilerParams(
            # Parallel batch axis -> shard grid steps across both TCs on v7x.
            dimension_semantics=("parallel",),
        ),
    )(x, w_t, b2)
    return out


if __name__ == "__main__":
    input_dim, output_dim = 60, 10
    batch = 8

    key = jax.random.PRNGKey(0)
    kx, kw, kb, kx2 = jax.random.split(key, 4)

    # Deterministic parameter init mimicking torch.nn.Linear:
    # uniform(-1/sqrt(fan_in), 1/sqrt(fan_in))
    bound = 1.0 / (input_dim ** 0.5)
    w = jax.random.uniform(kw, (output_dim, input_dim), jnp.float32, -bound, bound)
    b = jax.random.uniform(kb, (output_dim,), jnp.float32, -bound, bound)
    w_t = w.T  # (input_dim, output_dim)

    # Small-batch path (single full-array block).
    x = jax.random.normal(kx, (batch, input_dim), jnp.float32)
    out = jax.block_until_ready(logistic_regression_s(x, w_t, b))
    ref = x @ w_t + b
    assert out.shape == (batch, output_dim)
    assert jnp.allclose(out, ref, atol=1e-5, rtol=1e-5)

    # Tiled path (multiple grid steps; exercises batch tiling + resident weights).
    big_batch = 2048
    x_big = jax.random.normal(kx2, (big_batch, input_dim), jnp.float32)
    out_big = jax.block_until_ready(logistic_regression_s(x_big, w_t, b))
    ref_big = x_big @ w_t + b
    assert out_big.shape == (big_batch, output_dim)
    assert jnp.allclose(out_big, ref_big, atol=1e-5, rtol=1e-5)

    print("KERNEL_OK")
</pallas_src>

<mosaic_0001>
module attributes {stable_mosaic.version = 11 : i64} {
  func.func @_linear_kernel(%arg0: i32, %arg1: memref<8x60xf32, #tpu.memory_space<vmem>>, %arg2: memref<60x10xf32, #tpu.memory_space<vmem>>, %arg3: memref<1x10xf32, #tpu.memory_space<vmem>>, %arg4: memref<8x10xf32, #tpu.memory_space<vmem>>) attributes {dimension_semantics = [#tpu.dimension_semantics<parallel>], iteration_bounds = array<i64: 1>, scalar_prefetch = 0 : i64, scratch_operands = 0 : i64, tpu.core_type = #tpu.core_type<tc>, window_params = [{transform_indices = @transform_0, window_bounds = array<i64: 8, 60>}, {pipeline_mode = #tpu.pipeline_mode<synchronous>, transform_indices = @transform_1, window_bounds = array<i64: 60, 10>}, {pipeline_mode = #tpu.pipeline_mode<synchronous>, transform_indices = @transform_2, window_bounds = array<i64: 1, 10>}, {transform_indices = @transform_3, window_bounds = array<i64: 8, 10>}]} {
    %c0 = arith.constant 0 : index
    %c0_0 = arith.constant 0 : index
    %0 = vector.load %arg1[%c0, %c0_0] : memref<8x60xf32, #tpu.memory_space<vmem>>, vector<8x60xf32>
    %c0_1 = arith.constant 0 : index
    %c0_2 = arith.constant 0 : index
    %1 = vector.load %arg2[%c0_1, %c0_2] : memref<60x10xf32, #tpu.memory_space<vmem>>, vector<60x10xf32>
    %cst = arith.constant dense<0.000000e+00> : vector<8x10xf32>
    %2 = tpu.matmul %0, %1, %cst {dimension_numbers = #tpu.dot_dimension_numbers<[1], [0], [0], [1], [0, 0, 1, 1], [], []>} : vector<8x60xf32>, vector<60x10xf32>, vector<8x10xf32> -> vector<8x10xf32>
    %c0_3 = arith.constant 0 : index
    %c0_4 = arith.constant 0 : index
    %3 = vector.load %arg3[%c0_3, %c0_4] : memref<1x10xf32, #tpu.memory_space<vmem>>, vector<1x10xf32>
    %4 = vector.broadcast %3 : vector<1x10xf32> to vector<8x10xf32>
    %5 = arith.addf %2, %4 : vector<8x10xf32>
    %c0_5 = arith.constant 0 : index
    %c0_6 = arith.constant 0 : index
    %6 = vector.load %arg4[%c0_5, %c0_6] : memref<8x10xf32, #tpu.memory_space<vmem>>, vector<8x10xf32>
    tpu.vector_store %arg4[%c0_5, %c0_6], %5 {strides = array<i32>} : memref<8x10xf32, #tpu.memory_space<vmem>>, vector<8x10xf32>,
    return
  }
  func.func @transform_0(%arg0: i32) -> (i32, i32) {
    %c0_i32 = arith.constant 0 : i32
    %c0_i32_0 = arith.constant 0 : i32
    return %arg0, %c0_i32 : i32, i32
  }
  func.func @transform_1(%arg0: i32) -> (i32, i32) {
    %c0_i32 = arith.constant 0 : i32
    %c0_i32_0 = arith.constant 0 : i32
    %c0_i32_1 = arith.constant 0 : i32
    return %c0_i32, %c0_i32_0 : i32, i32
  }
  func.func @transform_2(%arg0: i32) -> (i32, i32) {
    %c0_i32 = arith.constant 0 : i32
    %c0_i32_0 = arith.constant 0 : i32
    %c0_i32_1 = arith.constant 0 : i32
    return %c0_i32, %c0_i32_0 : i32, i32
  }
  func.func @transform_3(%arg0: i32) -> (i32, i32) {
    %c0_i32 = arith.constant 0 : i32
    %c0_i32_0 = arith.constant 0 : i32
    return %arg0, %c0_i32 : i32, i32
  }
}

</mosaic_0001>

<llo_original>
// kernel: tpu_custom_call.1
$region0: #{tpu_custom_call.1}
  #allocation0 [shape = 'u32[]', space=smem, size = 0x4, offset = 0x4, fixed_abs, tag = 'smem constant byte address 0x4 - core index']
  #allocation1 [shape = 'u32[72,128]{1,0:T(1,128)}', space=vmem, size = 0x9000, scoped, tag = 'internal scratch']
  %s0 = inlined_call_operand.vmem [shape: f32[8,60], index: 0, kind: input, shape index: {}]
  %s1 = inlined_call_operand.vmem [shape: f32[60,10], index: 1, kind: input, shape index: {}]
  %s2 = inlined_call_operand.vmem [shape: f32[1,10], index: 2, kind: input, shape index: {}]
  %s3 = inlined_call_operand.hbm [shape: f32[8,10], index: 3, kind: output, shape index: {}]
  %s4 = sld [smem:[#allocation0]]
  $region22: #{tpu_custom_call.1} parent=0
    _
  %s6 = ssub.s32 1, %s4
  %s7 = scalar_select 0, %s6, %s4
  $region1: #{tpu_custom_call.1} parent=0
    #allocation2 [shape = 'u8[4096]{0}', space=vmem, size = 0x1000, scoped, tag = 'output window, operand 0, single buffered']
    #allocation3 [shape = 's32[1]{0}', space=sflag, size = 0x4, scoped, tag = 'scoped memory for tpu_custom_call.1']
    %8 = vsyncpa [#allocation3], 0
    // Predicated region
    $region2: #{tpu_custom_call.1} parent=1 // pred_check
      _
    $region3: #{tpu_custom_call.1} parent=1 // pred_check_branch
      %10 = sbr.rel (0) target = $region5
    $region4: #{tpu_custom_call.1} parent=1 // pred_region
      _
    $region5: #{tpu_custom_call.1} parent=1 // pred_fallthru
      _
    // Predicated region
    $region6: #{tpu_custom_call.1} parent=1 // pred_check
      _
    $region7: #{tpu_custom_call.1} parent=1 // pred_check_branch
      %12 = sbr.rel (0) target = $region9
    $region8: #{tpu_custom_call.1} parent=1 // pred_region
      _
    $region9: #{tpu_custom_call.1} parent=1 // pred_fallthru
      _
    // Predicated region
    $region10: #{tpu_custom_call.1} parent=1 // pred_check
      _
    $region11: #{tpu_custom_call.1} parent=1 // pred_check_branch
      %14 = sbr.rel (0) target = $region13
    $region12: #{tpu_custom_call.1} parent=1 // pred_region
      _
    $region13: #{tpu_custom_call.1} parent=1 // pred_fallthru
      _
    %v15 = vld [vmem:[%s0] sm:$0xff]
    %v16 = vld [vmem:[%s1] sm:$0xff]
    %v17 = vld [vmem:[%s1 + $0x8] sm:$0xff]
    %v18 = vld [vmem:[%s1 + $0x10] sm:$0xff]
    %v19 = vld [vmem:[%s1 + $0x18] sm:$0xff]
    %v20 = vld [vmem:[%s1 + $0x20] sm:$0xff]
    %v21 = vld [vmem:[%s1 + $0x28] sm:$0xff]
    %v22 = vld [vmem:[%s1 + $0x30] sm:$0xff]
    %v23 = vld [vmem:[%s1 + $0x38] sm:$0xf]
    %v24 = vld [vmem:[%s2] sm:$0x1]
    %v26 = vperm.slane %v24, 0
    %vm28 = vcmask 490496
    %v30 = vsel %vm28, %v15, 0
    %vm32 = vcmask 1043456
    %v34 = vsel %vm32, %v23, 0
    %36 = vmatpush.msra.mxu0 0.0
    %37 = vmatpush.msra.mxu0 0.0
    %38 = vmatpush.msra.mxu0 0.0
    %39 = vmatpush.msra.mxu0 0.0
    %40 = vmatpush.msra.mxu0 0.0
    %41 = vmatpush.msra.mxu0 0.0
    %42 = vmatpush.msra.mxu0 0.0
    %43 = vmatpush.msra.mxu0 0.0
    %44 = vmatpush.msra.mxu0 %v34
    %45 = vmatpush.msra.mxu0 %v22
    %46 = vmatpush.msra.mxu0 %v21
    %47 = vmatpush.msra.mxu0 %v20
    %48 = vmatpush.msra.mxu0 %v19
    %49 = vmatpush.msra.mxu0 %v18
    %50 = vmatpush.msra.mxu0 %v17
    %51 = vmatpush.msra.mxu0 %v16
    %52 = vmatmul.f32.gmra.mxu0 %v30
    %v53 = vpop.f32.mrf.mxu0
    %v54 = vadd.f32 %v26, %v53
    %55 = vdwg.mxu0
    %vm56 = vcmask 80896
    %57 = vst.msk [vmem:[#allocation2] sm:$0xff] %vm56, %v54
    // Predicated region
    $region14: #{tpu_custom_call.1} parent=1 // pred_check
      _
    $region15: #{tpu_custom_call.1} parent=1 // pred_check_branch
      %59 = sbr.rel (0) target = $region17
    $region16: #{tpu_custom_call.1} parent=1 // pred_region
      %61 = vsyncadd [#allocation3], 0
      %s63 = sshll.u32 [#allocation2], 4
      %s64 = int_to_ptr.vmem [resolvable:$true] %s63
      %s65 = sshll.u32 %s3, 4
      %s66 = int_to_ptr.hbm [resolvable:$true] %s65
      %68 = dma.vmem_to_hbm [thread:$0]  %s64, 128, %s66, [#allocation3]
    $region17: #{tpu_custom_call.1} parent=1 // pred_fallthru
      _
    // Predicated region
    $region18: #{tpu_custom_call.1} parent=1 // pred_check
      _
    $region19: #{tpu_custom_call.1} parent=1 // pred_check_branch
      %70 = sbr.rel (0) target = $region21
    $region20: #{tpu_custom_call.1} parent=1 // pred_region
      %72 = dma.done [#allocation3], 128
    $region21: #{tpu_custom_call.1} parent=1 // pred_fallthru
      _
    %73 = vsyncpa [#allocation3], 1

</llo_original>
